<compile_context>
chip_gen: v5e
topology: v5e:2x2
jax: 0.10.0
libtpu: 0.0.40
codegen_flags: <defaults>
</compile_context>

<pallas_src>
import functools

import jax
import jax.numpy as jnp
from jax import lax
from jax.experimental import pallas as pl
from jax.experimental.pallas import tpu as pltpu

BN_EPS = 1e-5
NEG_SLOPE = 0.2


def _ceil_to(a, b):
    return -(-a // b) * b


def _padded_bytes(shape, itemsize):
    """Rough VMEM footprint of a block: last dim -> 128 lanes, 2nd-last -> 8 sublanes."""
    s = list(shape)
    s[-1] = _ceil_to(s[-1], 128)
    if len(s) >= 2:
        s[-2] = _ceil_to(s[-2], 8)
    n = 1
    for d in s:
        n *= d
    return n * itemsize


def _vmem_budget():
    # ~3/4 of physical VMEM, capped at 96 MiB (v5e/v6e: 128 MiB, v7x: 64 MiB physical).
    try:
        cap = int(pltpu.get_tpu_info().vmem_capacity_bytes)
        return max(32 << 20, min((cap * 3) // 4, 96 << 20))
    except Exception:  # older jax without get_tpu_info, or no TPU info available
        return 48 << 20


def _conv_taps(w_ref, xb, wp, howp):
    """Four accumulated MXU matmuls over the 2x2 taps of the space-to-depth view.

    w_ref: (4, Cout, 4*Cin) bf16 resident weight slabs.
    xb:    (4*Cin, Lp) bf16 -- flattened (row-major over (Ho+1, Wo+1)) s2d image.
    Returns the 'extended' conv result (Cout, Ho*Wp) f32; columns with
    (col % Wp) >= Wo are garbage and are masked / dropped downstream.
    """
    acc = None
    for dh in range(2):
        for dw in range(2):
            s = dh * wp + dw                       # contiguous window start (static)
            xt = xb[:, s:s + howp]                 # (4*Cin, Ho*Wp), no reshape needed
            part = jnp.dot(w_ref[2 * dh + dw], xt,
                           preferred_element_type=jnp.float32)
            acc = part if acc is None else acc + part
    return acc


def _conv_stats_kernel(w_ref, mask_ref, x_ref, conv_ref, psum_ref, pssq_ref, *, wp, howp):
    # One image per grid step; per-image partial stats keep the grid fully "parallel".
    acc = _conv_taps(w_ref, x_ref[0], wp, howp)            # (Cout, Ho*Wp) f32
    conv_ref[0] = acc.astype(conv_ref.dtype)               # bf16 intermediate (halved HBM)
    accv = acc * mask_ref[...]                             # zero the garbage columns
    psum_ref[0] = jnp.sum(accv, axis=1, keepdims=True)     # stats from the f32 accumulator
    pssq_ref[0] = jnp.sum(accv * accv, axis=1, keepdims=True)


def _bn_lrelu_kernel(a_ref, b_ref, conv_ref, out_ref, *, wo):
    # conv_ref block: (1, Cout, Ho, Wp) bf16 (same HBM bytes as the flat pass-1 output).
    cb = conv_ref[0][:, :, :wo].astype(jnp.float32)        # drop the garbage column
    y = cb * a_ref[...] + b_ref[...]                       # folded BN scale / shift
    out_ref[0] = jnp.maximum(y, NEG_SLOPE * y)             # LeakyReLU(0.2)


def _fused_kernel(w_ref, g_ref, be_ref, mask_ref, x_ref, out_ref,
                  conv_sc, s_sc, ss_sc, *, wp, howp, m):
    # Small-shape fast path: conv + batch stats + BN + LeakyReLU in a single launch.
    n = pl.program_id(0)

    @pl.when(n == 0)
    def _():
        s_sc[...] = jnp.zeros_like(s_sc)
        ss_sc[...] = jnp.zeros_like(ss_sc)

    acc = _conv_taps(w_ref, x_ref[0], wp, howp)            # (Cout, Ho*Wp) f32
    conv_sc[n] = acc                                       # stays resident in VMEM
    accv = acc * mask_ref[...]
    s_sc[...] += jnp.sum(accv, axis=1, keepdims=True)
    ss_sc[...] += jnp.sum(accv * accv, axis=1, keepdims=True)

    @pl.when(n == pl.num_programs(0) - 1)
    def _():
        inv_m = 1.0 / m
        mean = s_sc[...] * inv_m                           # (Cout, 1)
        # TODO(synk): E[x^2]-E[x]^2 in f32 can lose digits when |mean| >> std; a shifted
        # sum-of-squares would match PyTorch more closely.
        var = jnp.maximum(ss_sc[...] * inv_m - mean * mean, 0.0)
        a = g_ref[...] * lax.rsqrt(var + BN_EPS)
        b = be_ref[...] - mean * a
        y = conv_sc[...] * a[None] + b[None]               # (N, Cout, Ho*Wp)
        out_ref[...] = jnp.maximum(y, NEG_SLOPE * y)


def d_block_forward(x, weight, gamma, beta, *, force_two_pass=False):
    """x: (N, Cin, H, W) f32.  weight: (Cout, Cin, 4, 4) f32.  gamma/beta: (Cout,) f32."""
    N, Cin, H, W = x.shape
    Cout = weight.shape[0]
    assert H % 2 == 0 and W % 2 == 0, "k=4, s=2, p=1 halves even spatial dims"
    Ho, Wo = H // 2, W // 2
    Hp, Wp = Ho + 1, Wo + 1
    C4 = 4 * Cin
    HoWp = Ho * Wp                       # 'extended' flat spatial length (one garbage col/row)
    L = Hp * Wp
    Lp = _ceil_to(L + 1, 128)            # room for the (dh=1, dw=1) tap window, lane aligned
    M = N * Ho * Wo

    # ---- glue (all bf16, ~1x activation bytes): pad + 2x2 space-to-depth + flatten ----
    xp = jnp.pad(x.astype(jnp.bfloat16), ((0, 0), (0, 0), (1, 1), (1, 1)))
    # xs2d[n, ci*4 + pr*2 + pc, i, j] = xp[n, ci, 2i + pr, 2j + pc]
    xs2d = (xp.reshape(N, Cin, Hp, 2, Wp, 2)
              .transpose(0, 1, 3, 5, 2, 4)          # (n, ci, pr, pc, i, j)
              .reshape(N, C4, L))
    xflat = jnp.pad(xs2d, ((0, 0), (0, 0), (0, Lp - L)))

    # w2[2*dh + dw, co, ci*4 + pr*2 + pc] = weight[co, ci, 2*dh + pr, 2*dw + pc]
    w2 = (weight.astype(jnp.bfloat16)
                .reshape(Cout, Cin, 2, 2, 2, 2)     # (co, ci, dh, pr, dw, pc)
                .transpose(2, 4, 0, 1, 3, 5)
                .reshape(4, Cout, C4))

    # Valid-column mask over the extended (Ho*Wp) layout: column j < Wo of each row.
    mask = ((jnp.arange(HoWp) % Wp) < Wo).astype(jnp.float32).reshape(1, HoWp)

    budget = _vmem_budget()
    cparams_par = pltpu.CompilerParams(dimension_semantics=("parallel",),
                                       vmem_limit_bytes=budget)
    cparams_seq = pltpu.CompilerParams(dimension_semantics=("arbitrary",),
                                       vmem_limit_bytes=budget)

    # Rough resident footprint of the fused path (double-buffered x stream + resident
    # weight/mask + conv scratch + resident output).
    fused_resident = (2 * _padded_bytes((C4, Lp), 2)
                      + _padded_bytes((4, Cout, C4), 2)
                      + _padded_bytes((1, HoWp), 4)
                      + 2 * N * _padded_bytes((Cout, HoWp), 4)
                      + 6 * _padded_bytes((Cout, 1), 4))

    if not force_two_pass and fused_resident <= budget // 2:
        # ---- fused fast path: one launch, no conv HBM round trip ----
        gamma2 = gamma.astype(jnp.float32).reshape(Cout, 1)
        beta2 = beta.astype(jnp.float32).reshape(Cout, 1)
        out_ext = pl.pallas_call(
            functools.partial(_fused_kernel, wp=Wp, howp=HoWp, m=float(M)),
            out_shape=jax.ShapeDtypeStruct((N, Cout, HoWp), jnp.float32),
            grid=(N,),
            in_specs=[
                pl.BlockSpec((4, Cout, C4), lambda n: (0, 0, 0)),    # resident weight taps
                pl.BlockSpec((Cout, 1), lambda n: (0, 0)),           # gamma
                pl.BlockSpec((Cout, 1), lambda n: (0, 0)),           # beta
                pl.BlockSpec((1, HoWp), lambda n: (0, 0)),           # valid-column mask
                pl.BlockSpec((1, C4, Lp), lambda n: (n, 0, 0)),      # streamed s2d image
            ],
            out_specs=pl.BlockSpec((N, Cout, HoWp), lambda n: (0, 0, 0)),  # resident output
            scratch_shapes=[
                pltpu.VMEM((N, Cout, HoWp), jnp.float32),            # conv kept on-chip
                pltpu.VMEM((Cout, 1), jnp.float32),
                pltpu.VMEM((Cout, 1), jnp.float32),
            ],
            compiler_params=cparams_seq,
        )(w2, gamma2, beta2, mask, xflat)
        # Drop the garbage column; the reshape is layout-free, the slice is tiny here.
        return out_ext.reshape(N, Cout, Ho, Wp)[:, :, :, :Wo]

    # ---- general path, pass 1: per-image conv GEMM + partial BN stats ----
    # TODO(synk): add an intra-image M tile and a K grid axis for very large Cin/Cout
    # (K >= 4096) so per-image blocks and the resident weight stay bounded in VMEM.
    conv_ext, psum, pssq = pl.pallas_call(
        functools.partial(_conv_stats_kernel, wp=Wp, howp=HoWp),
        out_shape=(
            jax.ShapeDtypeStruct((N, Cout, HoWp), jnp.bfloat16),
            jax.ShapeDtypeStruct((N, Cout, 1), jnp.float32),
            jax.ShapeDtypeStruct((N, Cout, 1), jnp.float32),
        ),
        grid=(N,),
        in_specs=[
            pl.BlockSpec((4, Cout, C4), lambda n: (0, 0, 0)),        # resident weight taps
            pl.BlockSpec((1, HoWp), lambda n: (0, 0)),               # valid-column mask
            pl.BlockSpec((1, C4, Lp), lambda n: (n, 0, 0)),          # streamed s2d image
        ],
        out_specs=[
            pl.BlockSpec((1, Cout, HoWp), lambda n: (n, 0, 0)),      # bf16 conv intermediate
            pl.BlockSpec((1, Cout, 1), lambda n: (n, 0, 0)),         # per-image partial sums
            pl.BlockSpec((1, Cout, 1), lambda n: (n, 0, 0)),
        ],
        compiler_params=cparams_par,     # independent per-image work -> megacore on v7x
    )(w2, mask, xflat)

    # ---- fold BatchNorm (training-mode, biased batch variance) into scale/shift ----
    mean = jnp.sum(psum[:, :, 0], axis=0) / M
    var = jnp.maximum(jnp.sum(pssq[:, :, 0], axis=0) / M - mean * mean, 0.0)
    inv_std = lax.rsqrt(var + BN_EPS)
    a = (gamma.astype(jnp.float32) * inv_std).reshape(Cout, 1, 1)
    b = (beta.astype(jnp.float32) - mean * gamma * inv_std).reshape(Cout, 1, 1)
    # TODO(synk): nn.BatchNorm2d also updates running_mean/running_var (module state);
    # only the forward output is produced here.

    # ---- pass 2: normalize + LeakyReLU, written directly in NCHW layout ----
    conv4 = conv_ext.reshape(N, Cout, Ho, Wp)        # layout-free view of the flat output
    out = pl.pallas_call(
        functools.partial(_bn_lrelu_kernel, wo=Wo),
        out_shape=jax.ShapeDtypeStruct((N, Cout, Ho, Wo), jnp.float32),
        grid=(N,),
        in_specs=[
            pl.BlockSpec((Cout, 1, 1), lambda n: (0, 0, 0)),
            pl.BlockSpec((Cout, 1, 1), lambda n: (0, 0, 0)),
            pl.BlockSpec((1, Cout, Ho, Wp), lambda n: (n, 0, 0, 0)),
        ],
        out_specs=pl.BlockSpec((1, Cout, Ho, Wo), lambda n: (n, 0, 0, 0)),
        compiler_params=cparams_par,
    )(a, b, conv4)
    return out


if __name__ == "__main__":
    # Small shapes consistent with the module: batch=2, in_channels=4, spatial=16,
    # out_channels=8 -> output (2, 8, 8, 8).
    N, Cin, H, W = 2, 4, 16, 16
    Cout = 8

    key = jax.random.PRNGKey(0)
    kx, kw = jax.random.split(key)
    x = jax.random.normal(kx, (N, Cin, H, W), dtype=jnp.float32)
    weight = jax.random.normal(kw, (Cout, Cin, 4, 4), dtype=jnp.float32) * 0.1
    gamma = jnp.ones((Cout,), dtype=jnp.float32)    # BatchNorm2d weight default
    beta = jnp.zeros((Cout,), dtype=jnp.float32)    # BatchNorm2d bias default

    # Reference: Conv (bf16 inputs, f32 accumulation, matching the kernel's MXU dtype)
    # -> BatchNorm (training-mode batch stats) -> LeakyReLU(0.2).
    conv_ref = lax.conv_general_dilated(
        x.astype(jnp.bfloat16), weight.astype(jnp.bfloat16),
        window_strides=(2, 2), padding=((1, 1), (1, 1)),
        dimension_numbers=("NCHW", "OIHW", "NCHW"),
        preferred_element_type=jnp.float32)
    mu = conv_ref.mean(axis=(0, 2, 3), keepdims=True)
    vr = ((conv_ref - mu) ** 2).mean(axis=(0, 2, 3), keepdims=True)
    yr = (conv_ref - mu) * lax.rsqrt(vr + BN_EPS) * gamma.reshape(1, -1, 1, 1) \
        + beta.reshape(1, -1, 1, 1)
    ref = jnp.where(yr >= 0, yr, NEG_SLOPE * yr)

    # Fused fast path (what these small shapes take by default).
    out_fused = d_block_forward(x, weight, gamma, beta)
    jax.block_until_ready(out_fused)
    assert out_fused.shape == (N, Cout, H // 2, W // 2), out_fused.shape
    assert jnp.allclose(out_fused, ref, atol=2e-2, rtol=2e-2), \
        float(jnp.max(jnp.abs(out_fused - ref)))

    # Also exercise the general two-pass path so it is compile/run/correctness tested.
    out_2p = d_block_forward(x, weight, gamma, beta, force_two_pass=True)
    jax.block_until_ready(out_2p)
    assert out_2p.shape == (N, Cout, H // 2, W // 2), out_2p.shape
    assert jnp.allclose(out_2p, ref, atol=2e-2, rtol=2e-2), \
        float(jnp.max(jnp.abs(out_2p - ref)))

    print("KERNEL_OK")
</pallas_src>

<mosaic_0001>
module attributes {stable_mosaic.version = 11 : i64} {
  func.func @_fused_kernel(%arg0: i32, %arg1: memref<4x8x16xbf16, #tpu.memory_space<vmem>>, %arg2: memref<8x1xf32, #tpu.memory_space<vmem>>, %arg3: memref<8x1xf32, #tpu.memory_space<vmem>>, %arg4: memref<1x72xf32, #tpu.memory_space<vmem>>, %arg5: memref<1x16x128xbf16, #tpu.memory_space<vmem>>, %arg6: memref<2x8x72xf32, #tpu.memory_space<vmem>>, %arg7: memref<2x8x72xf32, #tpu.memory_space<vmem>>, %arg8: memref<8x1xf32, #tpu.memory_space<vmem>>, %arg9: memref<8x1xf32, #tpu.memory_space<vmem>>) attributes {dimension_semantics = [#tpu.dimension_semantics<arbitrary>], iteration_bounds = array<i64: 2>, scalar_prefetch = 0 : i64, scratch_operands = 3 : i64, tpu.core_type = #tpu.core_type<tc>, window_params = [{pipeline_mode = #tpu.pipeline_mode<synchronous>, transform_indices = @transform_0, window_bounds = array<i64: 4, 8, 16>}, {pipeline_mode = #tpu.pipeline_mode<synchronous>, transform_indices = @transform_1, window_bounds = array<i64: 8, 1>}, {pipeline_mode = #tpu.pipeline_mode<synchronous>, transform_indices = @transform_2, window_bounds = array<i64: 8, 1>}, {pipeline_mode = #tpu.pipeline_mode<synchronous>, transform_indices = @transform_3, window_bounds = array<i64: 1, 72>}, {transform_indices = @transform_4, window_bounds = array<i64: 1, 16, 128>}, {pipeline_mode = #tpu.pipeline_mode<synchronous>, transform_indices = @transform_5, window_bounds = array<i64: 2, 8, 72>}]} {
    %c0_i32 = arith.constant 0 : i32
    %0 = arith.cmpi eq, %arg0, %c0_i32 : i32
    %1 = arith.extui %0 : i1 to i32
    %c0_i32_0 = arith.constant 0 : i32
    %2 = arith.cmpi ne, %1, %c0_i32_0 : i32
    scf.if %2 {
      %cst_30 = arith.constant 0.000000e+00 : f32
      %45 = vector.broadcast %cst_30 : f32 to vector<8x1xf32>
      %c0_31 = arith.constant 0 : index
      %c0_32 = arith.constant 0 : index
      %46 = vector.load %arg8[%c0_31, %c0_32] : memref<8x1xf32, #tpu.memory_space<vmem>>, vector<8x1xf32>
      tpu.vector_store %arg8[%c0_31, %c0_32], %45 {strides = array<i32>} : memref<8x1xf32, #tpu.memory_space<vmem>>, vector<8x1xf32>,
      %cst_33 = arith.constant 0.000000e+00 : f32
      %47 = vector.broadcast %cst_33 : f32 to vector<8x1xf32>
      %c0_34 = arith.constant 0 : index
      %c0_35 = arith.constant 0 : index
      %48 = vector.load %arg9[%c0_34, %c0_35] : memref<8x1xf32, #tpu.memory_space<vmem>>, vector<8x1xf32>
      tpu.vector_store %arg9[%c0_34, %c0_35], %47 {strides = array<i32>} : memref<8x1xf32, #tpu.memory_space<vmem>>, vector<8x1xf32>,
    } else {
    }
    %c0 = arith.constant 0 : index
    %c0_1 = arith.constant 0 : index
    %c0_2 = arith.constant 0 : index
    %3 = vector.load %arg5[%c0, %c0_1, %c0_2] : memref<1x16x128xbf16, #tpu.memory_space<vmem>>, vector<1x16x128xbf16>
    %4 = vector.shape_cast %3 : vector<1x16x128xbf16> to vector<16x128xbf16>
    %5 = vector.extract_strided_slice %4 {offsets = [0, 0], sizes = [16, 72], strides = [1, 1]} : vector<16x128xbf16> to vector<16x72xbf16>
    %c0_3 = arith.constant 0 : index
    %c0_4 = arith.constant 0 : index
    %c0_5 = arith.constant 0 : index
    %6 = vector.load %arg1[%c0_3, %c0_4, %c0_5] : memref<4x8x16xbf16, #tpu.memory_space<vmem>>, vector<1x8x16xbf16>
    %7 = vector.shape_cast %6 : vector<1x8x16xbf16> to vector<8x16xbf16>
    %cst = arith.constant dense<0.000000e+00> : vector<8x72xf32>
    %8 = tpu.matmul %7, %5, %cst {dimension_numbers = #tpu.dot_dimension_numbers<[1], [0], [0], [1], [0, 0, 1, 1], [], []>} : vector<8x16xbf16>, vector<16x72xbf16>, vector<8x72xf32> -> vector<8x72xf32>
    %9 = vector.extract_strided_slice %4 {offsets = [0, 1], sizes = [16, 72], strides = [1, 1]} : vector<16x128xbf16> to vector<16x72xbf16>
    %c1 = arith.constant 1 : index
    %c0_6 = arith.constant 0 : index
    %c0_7 = arith.constant 0 : index
    %10 = vector.load %arg1[%c1, %c0_6, %c0_7] : memref<4x8x16xbf16, #tpu.memory_space<vmem>>, vector<1x8x16xbf16>
    %11 = vector.shape_cast %10 : vector<1x8x16xbf16> to vector<8x16xbf16>
    %cst_8 = arith.constant dense<0.000000e+00> : vector<8x72xf32>
    %12 = tpu.matmul %11, %9, %cst_8 {dimension_numbers = #tpu.dot_dimension_numbers<[1], [0], [0], [1], [0, 0, 1, 1], [], []>} : vector<8x16xbf16>, vector<16x72xbf16>, vector<8x72xf32> -> vector<8x72xf32>
    %13 = arith.addf %8, %12 : vector<8x72xf32>
    %14 = vector.extract_strided_slice %4 {offsets = [0, 9], sizes = [16, 72], strides = [1, 1]} : vector<16x128xbf16> to vector<16x72xbf16>
    %c2 = arith.constant 2 : index
    %c0_9 = arith.constant 0 : index
    %c0_10 = arith.constant 0 : index
    %15 = vector.load %arg1[%c2, %c0_9, %c0_10] : memref<4x8x16xbf16, #tpu.memory_space<vmem>>, vector<1x8x16xbf16>
    %16 = vector.shape_cast %15 : vector<1x8x16xbf16> to vector<8x16xbf16>
    %cst_11 = arith.constant dense<0.000000e+00> : vector<8x72xf32>
    %17 = tpu.matmul %16, %14, %cst_11 {dimension_numbers = #tpu.dot_dimension_numbers<[1], [0], [0], [1], [0, 0, 1, 1], [], []>} : vector<8x16xbf16>, vector<16x72xbf16>, vector<8x72xf32> -> vector<8x72xf32>
    %18 = arith.addf %13, %17 : vector<8x72xf32>
    %19 = vector.extract_strided_slice %4 {offsets = [0, 10], sizes = [16, 72], strides = [1, 1]} : vector<16x128xbf16> to vector<16x72xbf16>
    %c3 = arith.constant 3 : index
    %c0_12 = arith.constant 0 : index
    %c0_13 = arith.constant 0 : index
    %20 = vector.load %arg1[%c3, %c0_12, %c0_13] : memref<4x8x16xbf16, #tpu.memory_space<vmem>>, vector<1x8x16xbf16>
    %21 = vector.shape_cast %20 : vector<1x8x16xbf16> to vector<8x16xbf16>
    %cst_14 = arith.constant dense<0.000000e+00> : vector<8x72xf32>
    %22 = tpu.matmul %21, %19, %cst_14 {dimension_numbers = #tpu.dot_dimension_numbers<[1], [0], [0], [1], [0, 0, 1, 1], [], []>} : vector<8x16xbf16>, vector<16x72xbf16>, vector<8x72xf32> -> vector<8x72xf32>
    %23 = arith.addf %18, %22 : vector<8x72xf32>
    %24 = arith.index_cast %arg0 : i32 to index
    %c0_15 = arith.constant 0 : index
    %c0_16 = arith.constant 0 : index
    %25 = vector.load %arg7[%24, %c0_15, %c0_16] : memref<2x8x72xf32, #tpu.memory_space<vmem>>, vector<1x8x72xf32>
    %26 = vector.shape_cast %25 : vector<1x8x72xf32> to vector<8x72xf32>
    %27 = vector.shape_cast %23 : vector<8x72xf32> to vector<1x8x72xf32>
    tpu.vector_store %arg7[%24, %c0_15, %c0_16], %27 {strides = array<i32>} : memref<2x8x72xf32, #tpu.memory_space<vmem>>, vector<1x8x72xf32>,
    %c0_17 = arith.constant 0 : index
    %c0_18 = arith.constant 0 : index
    %28 = vector.load %arg4[%c0_17, %c0_18] : memref<1x72xf32, #tpu.memory_space<vmem>>, vector<1x72xf32>
    %29 = vector.broadcast %28 : vector<1x72xf32> to vector<8x72xf32>
    %30 = arith.mulf %23, %29 : vector<8x72xf32>
    %c0_19 = arith.constant 0 : index
    %c0_20 = arith.constant 0 : index
    %31 = vector.load %arg8[%c0_19, %c0_20] : memref<8x1xf32, #tpu.memory_space<vmem>>, vector<8x1xf32>
    %cst_21 = arith.constant dense<0.000000e+00> : vector<8xf32>
    %32 = vector.multi_reduction <add>, %30, %cst_21 [1] : vector<8x72xf32> to vector<8xf32>
    %33 = vector.shape_cast %32 : vector<8xf32> to vector<8x1xf32>
    %34 = arith.addf %31, %33 : vector<8x1xf32>
    %c0_22 = arith.constant 0 : index
    %c0_23 = arith.constant 0 : index
    %35 = vector.load %arg8[%c0_22, %c0_23] : memref<8x1xf32, #tpu.memory_space<vmem>>, vector<8x1xf32>
    tpu.vector_store %arg8[%c0_22, %c0_23], %34 {strides = array<i32>} : memref<8x1xf32, #tpu.memory_space<vmem>>, vector<8x1xf32>,
    %c0_24 = arith.constant 0 : index
    %c0_25 = arith.constant 0 : index
    %36 = vector.load %arg9[%c0_24, %c0_25] : memref<8x1xf32, #tpu.memory_space<vmem>>, vector<8x1xf32>
    %37 = arith.mulf %30, %30 : vector<8x72xf32>
    %cst_26 = arith.constant dense<0.000000e+00> : vector<8xf32>
    %38 = vector.multi_reduction <add>, %37, %cst_26 [1] : vector<8x72xf32> to vector<8xf32>
    %39 = vector.shape_cast %38 : vector<8xf32> to vector<8x1xf32>
    %40 = arith.addf %36, %39 : vector<8x1xf32>
    %c0_27 = arith.constant 0 : index
    %c0_28 = arith.constant 0 : index
    %41 = vector.load %arg9[%c0_27, %c0_28] : memref<8x1xf32, #tpu.memory_space<vmem>>, vector<8x1xf32>
    tpu.vector_store %arg9[%c0_27, %c0_28], %40 {strides = array<i32>} : memref<8x1xf32, #tpu.memory_space<vmem>>, vector<8x1xf32>,
    %c1_i32 = arith.constant 1 : i32
    %42 = arith.cmpi eq, %arg0, %c1_i32 : i32
    %43 = arith.extui %42 : i1 to i32
    %c0_i32_29 = arith.constant 0 : i32
    %44 = arith.cmpi ne, %43, %c0_i32_29 : i32
    scf.if %44 {
      %c0_30 = arith.constant 0 : index
      %c0_31 = arith.constant 0 : index
      %45 = vector.load %arg8[%c0_30, %c0_31] : memref<8x1xf32, #tpu.memory_space<vmem>>, vector<8x1xf32>
      %cst_32 = arith.constant 7.812500e-03 : f32
      %46 = vector.broadcast %cst_32 : f32 to vector<8x1xf32>
      %47 = arith.mulf %45, %46 : vector<8x1xf32>
      %c0_33 = arith.constant 0 : index
      %c0_34 = arith.constant 0 : index
      %48 = vector.load %arg9[%c0_33, %c0_34] : memref<8x1xf32, #tpu.memory_space<vmem>>, vector<8x1xf32>
      %cst_35 = arith.constant 7.812500e-03 : f32
      %49 = vector.broadcast %cst_35 : f32 to vector<8x1xf32>
      %50 = arith.mulf %48, %49 : vector<8x1xf32>
      %51 = arith.mulf %47, %47 : vector<8x1xf32>
      %52 = arith.subf %50, %51 : vector<8x1xf32>
      %cst_36 = arith.constant 0.000000e+00 : f32
      %53 = vector.broadcast %cst_36 : f32 to vector<8x1xf32>
      %54 = arith.maximumf %52, %53 : vector<8x1xf32>
      %c0_37 = arith.constant 0 : index
      %c0_38 = arith.constant 0 : index
      %55 = vector.load %arg2[%c0_37, %c0_38] : memref<8x1xf32, #tpu.memory_space<vmem>>, vector<8x1xf32>
      %cst_39 = arith.constant 9.99999974E-6 : f32
      %56 = vector.broadcast %cst_39 : f32 to vector<8x1xf32>
      %57 = arith.addf %54, %56 : vector<8x1xf32>
      %58 = math.rsqrt %57 : vector<8x1xf32>
      %59 = arith.mulf %55, %58 : vector<8x1xf32>
      %c0_40 = arith.constant 0 : index
      %c0_41 = arith.constant 0 : index
      %60 = vector.load %arg3[%c0_40, %c0_41] : memref<8x1xf32, #tpu.memory_space<vmem>>, vector<8x1xf32>
      %61 = arith.mulf %47, %59 : vector<8x1xf32>
      %62 = arith.subf %60, %61 : vector<8x1xf32>
      %c0_42 = arith.constant 0 : index
      %c0_43 = arith.constant 0 : index
      %c0_44 = arith.constant 0 : index
      %63 = vector.load %arg7[%c0_42, %c0_43, %c0_44] : memref<2x8x72xf32, #tpu.memory_space<vmem>>, vector<2x8x72xf32>
      %64 = vector.shape_cast %59 : vector<8x1xf32> to vector<1x8x1xf32>
      %65 = vector.broadcast %64 : vector<1x8x1xf32> to vector<2x8x72xf32>
      %66 = arith.mulf %63, %65 : vector<2x8x72xf32>
      %67 = vector.shape_cast %62 : vector<8x1xf32> to vector<1x8x1xf32>
      %68 = vector.broadcast %67 : vector<1x8x1xf32> to vector<2x8x72xf32>
      %69 = arith.addf %66, %68 : vector<2x8x72xf32>
      %cst_45 = arith.constant 2.000000e-01 : f32
      %70 = vector.broadcast %cst_45 : f32 to vector<2x8x72xf32>
      %71 = arith.mulf %70, %69 : vector<2x8x72xf32>
      %72 = arith.maximumf %69, %71 : vector<2x8x72xf32>
      %c0_46 = arith.constant 0 : index
      %c0_47 = arith.constant 0 : index
      %c0_48 = arith.constant 0 : index
      %73 = vector.load %arg6[%c0_46, %c0_47, %c0_48] : memref<2x8x72xf32, #tpu.memory_space<vmem>>, vector<2x8x72xf32>
      tpu.vector_store %arg6[%c0_46, %c0_47, %c0_48], %72 {strides = array<i32>} : memref<2x8x72xf32, #tpu.memory_space<vmem>>, vector<2x8x72xf32>,
    } else {
    }
    return
  }
  func.func @transform_0(%arg0: i32) -> (i32, i32, i32) {
    %c0_i32 = arith.constant 0 : i32
    %c0_i32_0 = arith.constant 0 : i32
    %c0_i32_1 = arith.constant 0 : i32
    %c0_i32_2 = arith.constant 0 : i32
    return %c0_i32, %c0_i32_0, %c0_i32_1 : i32, i32, i32
  }
  func.func @transform_1(%arg0: i32) -> (i32, i32) {
    %c0_i32 = arith.constant 0 : i32
    %c0_i32_0 = arith.constant 0 : i32
    %c0_i32_1 = arith.constant 0 : i32
    return %c0_i32, %c0_i32_0 : i32, i32
  }
  func.func @transform_2(%arg0: i32) -> (i32, i32) {
    %c0_i32 = arith.constant 0 : i32
    %c0_i32_0 = arith.constant 0 : i32
    %c0_i32_1 = arith.constant 0 : i32
    return %c0_i32, %c0_i32_0 : i32, i32
  }
  func.func @transform_3(%arg0: i32) -> (i32, i32) {
    %c0_i32 = arith.constant 0 : i32
    %c0_i32_0 = arith.constant 0 : i32
    %c0_i32_1 = arith.constant 0 : i32
    return %c0_i32, %c0_i32_0 : i32, i32
  }
  func.func @transform_4(%arg0: i32) -> (i32, i32, i32) {
    %c0_i32 = arith.constant 0 : i32
    %c0_i32_0 = arith.constant 0 : i32
    %c0_i32_1 = arith.constant 0 : i32
    return %arg0, %c0_i32, %c0_i32_0 : i32, i32, i32
  }
  func.func @transform_5(%arg0: i32) -> (i32, i32, i32) {
    %c0_i32 = arith.constant 0 : i32
    %c0_i32_0 = arith.constant 0 : i32
    %c0_i32_1 = arith.constant 0 : i32
    %c0_i32_2 = arith.constant 0 : i32
    return %c0_i32, %c0_i32_0, %c0_i32_1 : i32, i32, i32
  }
}

</mosaic_0001>

<llo_original>
// kernel: tpu_custom_call.1
$region0: #{tpu_custom_call.1}
  #allocation0 [shape = 'u32[]', space=smem, size = 0x4, offset = 0x4, fixed_abs, tag = 'smem constant byte address 0x4 - core index']
  #allocation1 [shape = 'u32[72,128]{1,0:T(1,128)}', space=vmem, size = 0x9000, scoped, tag = 'internal scratch']
  #allocation2 [shape = 'f32[2,8,72]{2,1,0:T(8,128)}', space=vmem, size = 0x2000, scoped, tag = 'scratch operand']
  #allocation3 [shape = 'f32[8,1]{1,0:T(8,128)}', space=vmem, size = 0x1000, scoped, tag = 'scratch operand']
  #allocation4 [shape = 'f32[8,1]{1,0:T(8,128)}', space=vmem, size = 0x1000, scoped, tag = 'scratch operand']
  %s0 = inlined_call_operand.vmem [shape: bf16[4,8,16], index: 0, kind: input, shape index: {}]
  %s1 = inlined_call_operand.vmem [shape: f32[8,1], index: 1, kind: input, shape index: {}]
  %s2 = inlined_call_operand.vmem [shape: f32[8,1], index: 2, kind: input, shape index: {}]
  %s3 = inlined_call_operand.vmem [shape: f32[1,72], index: 3, kind: input, shape index: {}]
  %s4 = inlined_call_operand.hbm [shape: bf16[2,16,128], index: 4, kind: input, shape index: {}]
  %s5 = inlined_call_operand.hbm [shape: f32[2,8,72], index: 5, kind: output, shape index: {}]
  %s6 = sld [smem:[#allocation0]]
  $region65: #{tpu_custom_call.1} parent=0
    _
  %s8 = ssub.s32 1, %s6
  %s9 = scalar_select 0, %s8, %s6
  $region1: #{tpu_custom_call.1} parent=0
    #allocation5 [shape = 'u8[8192]{0}', space=vmem, size = 0x2000, scoped, tag = 'input window, operand 4']
    #allocation6 [shape = 's32[2]{0}', space=sflag, size = 0x8, scoped, tag = 'scoped memory for tpu_custom_call.1']
    #allocation7 [shape = 's32[2]{0}', space=sflag, size = 0x8, scoped, tag = 'scoped memory for tpu_custom_call.1']
    #allocation8 [shape = 'u8[8192]{0}', space=vmem, size = 0x2000, scoped, tag = 'output window, operand 0, single buffered']
    %10 = vsyncpa [#allocation6], 0
    %s11 = scalar_lea.sflag [#allocation6], 1
    %12 = vsyncpa %s11, 0
    %13 = vsyncpa [#allocation7], 0
    loop: start=0, step=1, limit=4
    $region2: #{tpu_custom_call.1} parent=1 // loop_pre_header
      _
    $region3: #{tpu_custom_call.1} parent=1 // loop_header
      %s15 = sphi 0, %s19
      %p16 = scmp.ge.s32.totalorder %s15, 4
      %s23 = sphi 0, %s23
      %s25 = sphi 0, %s23
      %s26 = sphi 0, %s25
      %s40 = sphi 0, %s26
      %s44 = sphi 0, %s44
      %s46 = sphi 0, %s44
      %s47 = sphi 0, %s46
      %s61 = sphi 0, %s47
      %s65 = sphi 0, %s65
      %s67 = sphi 0, %s65
      %s68 = sphi 0, %s67
      %s82 = sphi 0, %s68
      %s86 = sphi 0, %s86
      %s88 = sphi 0, %s86
      %s89 = sphi 0, %s88
      %s103 = sphi 0, %s89
      %s109 = sphi 0, %s111
      %s112 = sphi 0, %s109
      %s113 = sphi 0, %s112
      %s129 = sphi 0, %s113
      %s133 = sphi 0, %s133
      %s135 = sphi 0, %s133
      %s136 = sphi 0, %s135
      %s150 = sphi 0, %s136
    $region4: #{tpu_custom_call.1} parent=1 // loop_header_branch
      %18 = sbr.rel (%p16) target = $region8
    $region5: #{tpu_custom_call.1} parent=1 // loop_body
      %s20 = ssub.s32 %s15, 1
      %s21 = ssub.s32 %s15, 2
      %s22 = sadd.s32 %s15, 1
      %s24 = sadd.s32 %s23, 1
      %p27 = scmp.eq.s32.totalorder %s15, 1
      %p28 = scmp.ne.s32.totalorder %s23, %s25
      %p29 = scmp.eq.s32.totalorder %s15, 0
      %p30 = por %p28, %p29
      %p31 = scmp.ne.s32.totalorder %s23, %s25
      %p32 = scmp.eq.s32.totalorder %s20, 1
      %p33 = por %p31, %p32
      %p34 = scmp.ne.s32.totalorder %s25, %s26
      %p35 = scmp.eq.s32.totalorder %s20, 0
      %p36 = por %p34, %p35
      %p37 = scmp.ne.s32.totalorder %s25, %s26
      %p38 = scmp.eq.s32.totalorder %s21, 1
      %p39 = por %p37, %p38
      %p41 = scmp.ne.s32.totalorder %s26, %s40
      %p42 = scmp.eq.s32.totalorder %s21, 0
      %p43 = por %p41, %p42
      %s45 = sadd.s32 %s44, 1
      %p48 = scmp.eq.s32.totalorder %s15, 1
      %p49 = scmp.ne.s32.totalorder %s44, %s46
      %p50 = scmp.eq.s32.totalorder %s15, 0
      %p51 = por %p49, %p50
      %p52 = scmp.ne.s32.totalorder %s44, %s46
      %p53 = scmp.eq.s32.totalorder %s20, 1
      %p54 = por %p52, %p53
      %p55 = scmp.ne.s32.totalorder %s46, %s47
      %p56 = scmp.eq.s32.totalorder %s20, 0
      %p57 = por %p55, %p56
      %p58 = scmp.ne.s32.totalorder %s46, %s47
      %p59 = scmp.eq.s32.totalorder %s21, 1
      %p60 = por %p58, %p59
      %p62 = scmp.ne.s32.totalorder %s47, %s61
      %p63 = scmp.eq.s32.totalorder %s21, 0
      %p64 = por %p62, %p63
      %s66 = sadd.s32 %s65, 1
      %p69 = scmp.eq.s32.totalorder %s15, 1
      %p70 = scmp.ne.s32.totalorder %s65, %s67
      %p71 = scmp.eq.s32.totalorder %s15, 0
      %p72 = por %p70, %p71
      %p73 = scmp.ne.s32.totalorder %s65, %s67
      %p74 = scmp.eq.s32.totalorder %s20, 1
      %p75 = por %p73, %p74
      %p76 = scmp.ne.s32.totalorder %s67, %s68
      %p77 = scmp.eq.s32.totalorder %s20, 0
      %p78 = por %p76, %p77
      %p79 = scmp.ne.s32.totalorder %s67, %s68
      %p80 = scmp.eq.s32.totalorder %s21, 1
      %p81 = por %p79, %p80
      %p83 = scmp.ne.s32.totalorder %s68, %s82
      %p84 = scmp.eq.s32.totalorder %s21, 0
      %p85 = por %p83, %p84
      %s87 = sadd.s32 %s86, 1
      %p90 = scmp.eq.s32.totalorder %s15, 1
      %p91 = scmp.ne.s32.totalorder %s86, %s88
      %p92 = scmp.eq.s32.totalorder %s15, 0
      %p93 = por %p91, %p92
      %p94 = scmp.ne.s32.totalorder %s86, %s88
      %p95 = scmp.eq.s32.totalorder %s20, 1
      %p96 = por %p94, %p95
      %p97 = scmp.ne.s32.totalorder %s88, %s89
      %p98 = scmp.eq.s32.totalorder %s20, 0
      %p99 = por %p97, %p98
      %p100 = scmp.ne.s32.totalorder %s88, %s89
      %p101 = scmp.eq.s32.totalorder %s21, 1
      %p102 = por %p100, %p101
      %p104 = scmp.ne.s32.totalorder %s89, %s103
      %p105 = scmp.eq.s32.totalorder %s21, 0
      %p106 = por %p104, %p105
      %s107 = ssub.s32 %s15, %s22
      %p108 = scmp.eq.s32.totalorder %s107, 0
      %s110 = sadd.s32 %s109, 1
      %s111 = scalar_select %p108, %s109, %s110
      %p114 = pneg %p108
      %p115 = scmp.eq.s32.totalorder %s15, 1
      %p116 = por %p114, %p115
      %p117 = scmp.ne.s32.totalorder %s109, %s112
      %p118 = scmp.eq.s32.totalorder %s15, 0
      %p119 = por %p117, %p118
      %p120 = scmp.ne.s32.totalorder %s109, %s112
      %p121 = scmp.eq.s32.totalorder %s20, 1
      %p122 = por %p120, %p121
      %p123 = scmp.ne.s32.totalorder %s112, %s113
      %p124 = scmp.eq.s32.totalorder %s20, 0
      %p125 = por %p123, %p124
      %p126 = scmp.ne.s32.totalorder %s112, %s113
      %p127 = scmp.eq.s32.totalorder %s21, 1
      %p128 = por %p126, %p127
      %p130 = scmp.ne.s32.totalorder %s113, %s129
      %p131 = scmp.eq.s32.totalorder %s21, 0
      %p132 = por %p130, %p131
      %s134 = sadd.s32 %s133, 1
      %p137 = scmp.eq.s32.totalorder %s15, 1
      %p138 = scmp.ne.s32.totalorder %s133, %s135
      %p139 = scmp.eq.s32.totalorder %s15, 0
      %p140 = por %p138, %p139
      %p141 = scmp.ne.s32.totalorder %s133, %s135
      %p142 = scmp.eq.s32.totalorder %s20, 1
      %p143 = por %p141, %p142
      %p144 = scmp.ne.s32.totalorder %s135, %s136
      %p145 = scmp.eq.s32.totalorder %s20, 0
      %p146 = por %p144, %p145
      %p147 = scmp.ne.s32.totalorder %s135, %s136
      %p148 = scmp.eq.s32.totalorder %s21, 1
      %p149 = por %p147, %p148
      %p151 = scmp.ne.s32.totalorder %s136, %s150
      %p152 = scmp.eq.s32.totalorder %s21, 0
      %p153 = por %p151, %p152
      %p154 = scmp.le.s32.totalorder 1, %s15
      %p155 = scmp.lt.s32.totalorder %s15, 3
      %p156 = pnand %p154, %p155
      %p157 = pneg %p156
      // Predicated region
      $region9: #{tpu_custom_call.1} parent=5 // pred_check
        _
      $region10: #{tpu_custom_call.1} parent=5 // pred_check_branch
        %159 = sbr.rel (%p156) target = $region12
      $region11: #{tpu_custom_call.1} parent=5 // pred_region
        %s160 = ssub.s32 %s15, 1
        // Predicated region
        $region13: #{tpu_custom_call.1} parent=11 // pred_check
          %p161 = pneg %p36
        $region14: #{tpu_custom_call.1} parent=11 // pred_check_branch
          %163 = sbr.rel (%p161) target = $region16
        $region15: #{tpu_custom_call.1} parent=11 // pred_region
          _
        $region16: #{tpu_custom_call.1} parent=11 // pred_fallthru
          _
        // Predicated region
        $region17: #{tpu_custom_call.1} parent=11 // pred_check
          %p164 = pneg %p57
        $region18: #{tpu_custom_call.1} parent=11 // pred_check_branch
          %166 = sbr.rel (%p164) target = $region20
        $region19: #{tpu_custom_call.1} parent=11 // pred_region
          _
        $region20: #{tpu_custom_call.1} parent=11 // pred_fallthru
          _
        // Predicated region
        $region21: #{tpu_custom_call.1} parent=11 // pred_check
          %p167 = pneg %p78
        $region22: #{tpu_custom_call.1} parent=11 // pred_check_branch
          %169 = sbr.rel (%p167) target = $region24
        $region23: #{tpu_custom_call.1} parent=11 // pred_region
          _
        $region24: #{tpu_custom_call.1} parent=11 // pred_fallthru
          _
        // Predicated region
        $region25: #{tpu_custom_call.1} parent=11 // pred_check
          %p170 = pneg %p99
        $region26: #{tpu_custom_call.1} parent=11 // pred_check_branch
          %172 = sbr.rel (%p170) target = $region28
        $region27: #{tpu_custom_call.1} parent=11 // pred_region
          _
        $region28: #{tpu_custom_call.1} parent=11 // pred_fallthru
          _
      $region12: #{tpu_custom_call.1} parent=5 // pred_fallthru
        _
      %p173 = scmp.lt.s32.totalorder %s15, 2
      // Predicated region
      $region29: #{tpu_custom_call.1} parent=5 // pred_check
        %p174 = pneg %p173
      $region30: #{tpu_custom_call.1} parent=5 // pred_check_branch
        %176 = sbr.rel (%p174) target = $region32
      $region31: #{tpu_custom_call.1} parent=5 // pred_region
        // Predicated region
        $region33: #{tpu_custom_call.1} parent=31 // pred_check
          %p177 = pneg %p119
        $region34: #{tpu_custom_call.1} parent=31 // pred_check_branch
          %179 = sbr.rel (%p177) target = $region36
        $region35: #{tpu_custom_call.1} parent=31 // pred_region
          %s180 = sand.u32 %s109, 1
          %s181 = scalar_lea.sflag [#allocation6], %s180
          %s182 = sand.u32 %s109, 1
          %s183 = smul.addr %s182, 8
          %s184 = scalar_lea.vmem [#allocation5], %s183
          %186 = vsyncadd %s181, 0
          %s187 = smul.addr %s15, 2
          %s188 = smul.addr %s187, 4
          %s189 = scalar_lea.hbm %s4, %s188
          %s190 = sshll.u32 %s189, 4
          %s191 = int_to_ptr.hbm [resolvable:$true] %s190
          %s192 = sshll.u32 %s184, 4
          %s193 = int_to_ptr.vmem [resolvable:$true] %s192
          %198 = dma.hbm_to_vmem [thread:$0]  %s191, 128, %s193, %s181, 64, 64, 4
        $region36: #{tpu_custom_call.1} parent=31 // pred_fallthru
          _
      $region32: #{tpu_custom_call.1} parent=5 // pred_fallthru
        _
      %p199 = scmp.le.s32.totalorder 1, %s15
      %p200 = scmp.lt.s32.totalorder %s15, 3
      %p201 = pnand %p199, %p200
      %p202 = pneg %p201
      // Predicated region
      $region37: #{tpu_custom_call.1} parent=5 // pred_check
        _
      $region38: #{tpu_custom_call.1} parent=5 // pred_check_branch
        %204 = sbr.rel (%p201) target = $region40
      $region39: #{tpu_custom_call.1} parent=5 // pred_region
        %s205 = ssub.s32 %s15, 1
        %s206 = sand.u32 %s112, 1
        %s207 = scalar_lea.sflag [#allocation6], %s206
        %s208 = sand.u32 %s112, 1
        %s209 = smul.addr %s208, 8
        %s210 = scalar_lea.vmem [#allocation5], %s209
        // Predicated region
        $region41: #{tpu_custom_call.1} parent=39 // pred_check
          %p211 = pneg %p125
        $region42: #{tpu_custom_call.1} parent=39 // pred_check_branch
          %213 = sbr.rel (%p211) target = $region44
        $region43: #{tpu_custom_call.1} parent=39 // pred_region
          %215 = dma.done %s207, 128
        $region44: #{tpu_custom_call.1} parent=39 // pred_fallthru
          _
        %p216 = pneg %p36
        %p217 = pneg %p33
        %p218 = pneg %p57
        %p219 = pneg %p54
        %p220 = pneg %p78
        %p221 = pneg %p75
        %p222 = pneg %p99
        %p223 = pneg %p96
        %s224 = sand.u32 %s112, 1
        %s225 = scalar_lea.sflag [#allocation6], %s224
        %s226 = sand.u32 %s112, 1
        %s227 = smul.addr %s226, 8
        %s228 = scalar_lea.vmem [#allocation5], %s227
        %p229 = pneg %p125
        %p230 = pneg %p122
        %p231 = pneg %p146
        %p232 = pneg %p143
        %p234 = scmp.eq.s32.totalorder %s20, 0
        // Predicated region
        $region45: #{tpu_custom_call.1} parent=39 // pred_check
          %p235 = pneg %p234
        $region46: #{tpu_custom_call.1} parent=39 // pred_check_branch
          %237 = sbr.rel (%p235) target = $region48
        $region47: #{tpu_custom_call.1} parent=39 // pred_region
          %vm238 = vcmask 7168
          %239 = vst.msk [vmem:[#allocation3] sm:$0xff] %vm238, 0.0
          %240 = vst.msk [vmem:[#allocation4] sm:$0xff] %vm238, 0.0
        $region48: #{tpu_custom_call.1} parent=39 // pred_fallthru
          _
        %v241 = vld [vmem:[%s210] sm:$0xf]
        %v242 = vld [vmem:[%s210 + $0x4] sm:$0xf]
        %v243 = vld [vmem:[%s0] sm:$0xf]
        %s244 = scalar_lea.vmem %s0, 4
        %v245 = vld [vmem:[%s244] sm:$0xf]
        %v248 = vunpack.c.l.b16 %v241
        %v249 = vunpack.c.l.b16 %v242
        %v250 = vpack.c.b16 %v249, %v248
        %251 = vrot.lane.b32.xlu0 %v250, 127
        %v252 = vpop.permute.xlu0 %251
        %vm254 = vcmask 130048
        %v256 = vsel %vm254, %v245, 0
        %258 = vmatpush.bf16.msra.mxu0 0
        %259 = vmatpush.bf16.msra.mxu0 0
        %260 = vmatpush.bf16.msra.mxu0 0
        %261 = vmatpush.bf16.msra.mxu0 0
        %262 = vmatpush.bf16.msra.mxu0 0
        %263 = vmatpush.bf16.msra.mxu0 0
        %264 = vmatpush.bf16.msra.mxu0 0
        %265 = vmatpush.bf16.msra.mxu0 %v252
        %266 = vmatmul.bf16.gmra.mxu0 %v256
        %v267 = vpop.f32.mrf.mxu0
        %v268 = vadd.f32 0.0, %v267
        %v269 = vpop.f32.mrf.mxu0
        %270 = vdwg.mxu0
        %v273 = vsel %vm254, %v243, 0
        %275 = vmatpush.bf16.msra.mxu0 0
        %276 = vmatpush.bf16.msra.mxu0 0
        %277 = vmatpush.bf16.msra.mxu0 0
        %278 = vmatpush.bf16.msra.mxu0 0
        %279 = vmatpush.bf16.msra.mxu0 0
        %280 = vmatpush.bf16.msra.mxu0 0
        %281 = vmatpush.bf16.msra.mxu0 0
        %282 = vmatpush.bf16.msra.mxu0 %v250
        %283 = vmatmul.bf16.gmra.mxu0 %v273
        %v284 = vpop.f32.mrf.mxu0
        %v285 = vadd.f32 %v268, %v284
        %v286 = vpop.f32.mrf.mxu0
        %287 = vdwg.mxu0
        %s288 = scalar_lea.vmem %s0, 8
        %v289 = vld [vmem:[%s288] sm:$0xf]
        %290 = vrot.lane.b32.xlu0 %v250, 119
        %v291 = vpop.permute.xlu0 %290
        %v294 = vsel %vm254, %v289, 0
        %296 = vmatpush.bf16.msra.mxu0 0
        %297 = vmatpush.bf16.msra.mxu0 0
        %298 = vmatpush.bf16.msra.mxu0 0
        %299 = vmatpush.bf16.msra.mxu0 0
        %300 = vmatpush.bf16.msra.mxu0 0
        %301 = vmatpush.bf16.msra.mxu0 0
        %302 = vmatpush.bf16.msra.mxu0 0
        %303 = vmatpush.bf16.msra.mxu0 %v291
        %304 = vmatmul.bf16.gmra.mxu0 %v294
        %v305 = vpop.f32.mrf.mxu0
        %v306 = vadd.f32 0.0, %v305
        %v307 = vpop.f32.mrf.mxu0
        %308 = vdwg.mxu0
        %v309 = vadd.f32 %v285, %v306
        %s310 = scalar_lea.vmem %s0, 12
        %v311 = vld [vmem:[%s310] sm:$0xf]
        %312 = vrot.lane.b32.xlu0 %v250, 118
        %v313 = vpop.permute.xlu0 %312
        %v316 = vsel %vm254, %v311, 0
        %318 = vmatpush.bf16.msra.mxu0 0
        %319 = vmatpush.bf16.msra.mxu0 0
        %320 = vmatpush.bf16.msra.mxu0 0
        %321 = vmatpush.bf16.msra.mxu0 0
        %322 = vmatpush.bf16.msra.mxu0 0
        %323 = vmatpush.bf16.msra.mxu0 0
        %324 = vmatpush.bf16.msra.mxu0 0
        %325 = vmatpush.bf16.msra.mxu0 %v313
        %326 = vmatmul.bf16.gmra.mxu0 %v316
        %v327 = vpop.f32.mrf.mxu0
        %v328 = vadd.f32 0.0, %v327
        %v329 = vpop.f32.mrf.mxu0
        %330 = vdwg.mxu0
        %v331 = vadd.f32 %v309, %v328
        %s332 = smul.u32 %s20, 8
        %s333 = scalar_lea.vmem [#allocation2], %s332
        %vm334 = vcmask 588800
        %335 = vst.msk [vmem:[%s333] sm:$0xff] %vm334, %v331
        %v336 = vld [vmem:[%s3] sm:$0x1]
        %v338 = vperm.slane %v336, 0
        %v340 = vmul.f32 %v331, %v338
        %v341 = vld [vmem:[#allocation3] sm:$0xff]
        %v342 = vsel %vm334, %v340, 0.0
        %343 = vadd.xlane.f32.xlu0 %v342
        %v344 = vpop.xlane.xlu0 %343
        %v345 = vadd.f32 %v341, %v344
        %vm346 = vcmask 7168
        %347 = vst.msk [vmem:[#allocation3] sm:$0xff] %vm346, %v345
        %v348 = vld [vmem:[#allocation4] sm:$0xff]
        %v349 = vmul.f32 %v340, %v340
        %v350 = vsel %vm334, %v349, 0.0
        %351 = vadd.xlane.f32.xlu0 %v350
        %v352 = vpop.xlane.xlu0 %351
        %v353 = vadd.f32 %v348, %v352
        %354 = vst.msk [vmem:[#allocation4] sm:$0xff] %vm346, %v353
        %p355 = scmp.eq.s32.totalorder %s20, 1
        // Predicated region
        $region49: #{tpu_custom_call.1} parent=39 // pred_check
          %p356 = pneg %p355
        $region50: #{tpu_custom_call.1} parent=39 // pred_check_branch
          %358 = sbr.rel (%p356) target = $region52
        $region51: #{tpu_custom_call.1} parent=39 // pred_region
          %v359 = vld [vmem:[#allocation3] sm:$0xff]
          %v360 = vmul.f32 %v359, 0.0078125
          %v361 = vld [vmem:[#allocation4] sm:$0xff]
          %v362 = vmul.f32 %v361, 0.0078125
          %v363 = vmul.f32 %v360, %v360
          %v364 = vsub.f32 %v362, %v363
          %v365 = vmax.f32 %v364, 0.0
          %v366 = vld [vmem:[%s1] sm:$0xff]
          %v367 = vadd.f32 %v365, 1e-05
          %v368 = vrsqrt.pop %v367
          %v369 = vmul.f32 %v368, %v367
          %v370 = vmul.f32 %v369, %v368
          %v371 = vmul.f32 0.5, %v370
          %v372 = vsub.f32 1.5, %v371
          %v373 = vmul.f32 %v368, %v372
          %vm374 = vweird.f32 %v367
          %vm375 = vweird.f32 %v368
          %vm376 = vmor %vm374, %vm375
          %v377 = vsel %vm376, %v368, %v373
          %v378 = vmul.f32 %v366, %v377
          %v379 = vld [vmem:[%s2] sm:$0xff]
          %v380 = vmul.f32 %v360, %v378
          %v381 = vsub.f32 %v379, %v380
          %v382 = vld [vmem:[#allocation2] sm:$0xff]
          %v383 = vld [vmem:[#allocation2 + $0x8] sm:$0xff]
          %385 = vset.pattern.permute.xlu0 0
          %386 = vperm.xlu0 %385, %v378
          %v387 = vpop.permute.xlu0 %386
          %v389 = vmul.f32 %v382, %v387
          %v390 = vmul.f32 %v383, %v387
          %392 = vset.pattern.permute.xlu0 0
          %393 = vperm.xlu0 %392, %v381
          %v394 = vpop.permute.xlu0 %393
          %v396 = vadd.f32 %v389, %v394
          %v397 = vadd.f32 %v390, %v394
          %v398 = vmul.f32 %v396, 0.2
          %v399 = vmul.f32 %v397, 0.2
          %v400 = vmax.f32 %v396, %v398
          %v401 = vmax.f32 %v397, %v399
          %402 = vst.msk [vmem:[#allocation8] sm:$0xff] %vm334, %v400
          %403 = vst.msk [vmem:[#allocation8 + $0x8] sm:$0xff] %vm334, %v401
        $region52: #{tpu_custom_call.1} parent=39 // pred_fallthru
          _
        // Predicated region
        $region53: #{tpu_custom_call.1} parent=39 // pred_check
          %p404 = pneg %p143
        $region54: #{tpu_custom_call.1} parent=39 // pred_check_branch
          %406 = sbr.rel (%p404) target = $region56
        $region55: #{tpu_custom_call.1} parent=39 // pred_region
          %408 = vsyncadd [#allocation7], 0
          %s409 = sshll.u32 [#allocation8], 4
          %s410 = int_to_ptr.vmem [resolvable:$true] %s409
          %s411 = sshll.u32 %s5, 4
          %s412 = int_to_ptr.hbm [resolvable:$true] %s411
          %417 = dma.vmem_to_hbm [thread:$0]  %s410, 256, %s412, [#allocation7], 128, 128, 8
        $region56: #{tpu_custom_call.1} parent=39 // pred_fallthru
          _
        // Predicated region
        $region57: #{tpu_custom_call.1} parent=39 // pred_check
          %p418 = pneg %p143
        $region58: #{tpu_custom_call.1} parent=39 // pred_check_branch
          %420 = sbr.rel (%p418) target = $region60
        $region59: #{tpu_custom_call.1} parent=39 // pred_region
          %422 = dma.done [#allocation7], 256
        $region60: #{tpu_custom_call.1} parent=39 // pred_fallthru
          _
      $region40: #{tpu_custom_call.1} parent=5 // pred_fallthru
        _
      %p423 = scmp.le.s32.totalorder 2, %s15
      // Predicated region
      $region61: #{tpu_custom_call.1} parent=5 // pred_check
        %p424 = pneg %p423
      $region62: #{tpu_custom_call.1} parent=5 // pred_check_branch
        %426 = sbr.rel (%p424) target = $region64
      $region63: #{tpu_custom_call.1} parent=5 // pred_region
        %s427 = ssub.s32 %s15, 2
      $region64: #{tpu_custom_call.1} parent=5 // pred_fallthru
        _
    $region6: #{tpu_custom_call.1} parent=1 // loop_footer
      %s19 = sadd.s32 1, %s15
    $region7: #{tpu_custom_call.1} parent=1 // loop_footer_branch
      %14 = sbr.rel target = $region3
    $region8: #{tpu_custom_call.1} parent=1 // loop_exit
      _
    %428 = vsyncpa [#allocation6], 1
    %s429 = scalar_lea.sflag [#allocation6], 1
    %430 = vsyncpa %s429, 1
    %431 = vsyncpa [#allocation7], 1
    %s432 = scalar_lea.sflag [#allocation7], 1
    %433 = vsyncpa %s432, 1

</llo_original>
